<compile_context>
chip_gen: v7x
topology: tpu7x:2x2x1
jax: 0.10.0
libtpu: 0.0.40
codegen_flags: <defaults>
</compile_context>

<pallas_src>
import jax
import jax.numpy as jnp
from jax.experimental import pallas as pl
from jax.experimental.pallas import tpu as pltpu

EPS = 1e-5


def _round_up(x, m):
    return ((x + m - 1) // m) * m


def _adaln_kernel(x_ref, c_ref, w_ref, o_ref):
    # x_ref: (tm, D), c_ref: (tm, Dc), w_ref: (Dc, D), o_ref: (tm, D)

    # LayerNorm reduction in f32 for accuracy (VPU/XLU path).
    x = x_ref[...].astype(jnp.float32)
    mean = jnp.mean(x, axis=-1, keepdims=True)
    centered = x - mean
    var = jnp.mean(centered * centered, axis=-1, keepdims=True)
    normed = centered * jax.lax.rsqrt(var + EPS)

    # gamma = condition @ W^T on the MXU. When the weight was pre-cast to bf16
    # in the wrapper, match the condition tile so the MXU gets bf16 operands
    # (single-pass); accumulate in f32.
    c = c_ref[...]
    if c.dtype == jnp.float32 and w_ref.dtype == jnp.bfloat16:
        c = c.astype(jnp.bfloat16)
    gamma = jnp.dot(c, w_ref[...], preferred_element_type=jnp.float32)

    o_ref[...] = (normed * (gamma + 1.0)).astype(o_ref.dtype)


def adaptive_layer_norm(x, condition, weight_t, *, bf16_matmul=True,
                        target_step_bytes=4 << 20):
    """Fused AdaptiveLayerNorm forward.

    x:            (B, S, D)
    condition:    (B, S, Dc)
    weight_t:     (Dc, D)  == torch Linear weight (D, Dc) transposed.
    bf16_matmul:  feed the gamma matmul bf16 operands (f32 accumulate).
    """
    B, S, D = x.shape
    Dc = condition.shape[-1]
    assert weight_t.shape == (Dc, D)
    rows = B * S

    # TODO(synk): if the model dim is not a multiple of 128, pad D/Dc once in
    # the wrapper to keep loads/stores lane-dense (avoid masked vst).
    if bf16_matmul and weight_t.dtype == jnp.float32:
        weight_t = weight_t.astype(jnp.bfloat16)

    x2 = x.reshape(rows, D)
    c2 = condition.reshape(rows, Dc)

    isz = lambda a: jnp.dtype(a.dtype).itemsize
    # HBM traffic per row of a tile: x in + cond in + out.
    per_row_traffic = D * isz(x) + Dc * isz(condition) + D * isz(x)
    # VMEM per row: double-buffered x/cond/out tiles + f32 compute intermediates.
    per_row_vmem = 2 * per_row_traffic + 4 * D * 4
    w_bytes = Dc * D * isz(weight_t)  # resident, single-buffered

    # Generation-aware VMEM budget (~102 MiB usable on v5e/v6e, ~51 MiB on v7x).
    try:
        vmem_cap = pltpu.get_tpu_info().vmem_capacity_bytes
    except Exception:
        vmem_cap = 64 << 20  # conservative fallback (fits every generation)
    usable = int(vmem_cap * 0.8)

    # Row tile: target ~target_step_bytes of traffic per step, capped by the
    # VMEM budget and by the problem size; multiple of 8 sublanes.
    tm = target_step_bytes // per_row_traffic
    vmem_cap_rows = max(8, (usable - w_bytes - (4 << 20)) // per_row_vmem)
    tm = min(tm, vmem_cap_rows, _round_up(rows, 8))
    tm = max(8, (tm // 8) * 8)
    # Keep grid >= 2 so the v7x megacore shards the parallel axis over both TCs.
    if pl.cdiv(rows, tm) < 2 and rows > 8:
        tm = max(8, _round_up(pl.cdiv(rows, 2), 8))
    grid = pl.cdiv(rows, tm)

    working = tm * per_row_vmem + w_bytes
    vmem_limit = int(min(max(working + (8 << 20), 32 << 20), usable))

    cost = pl.CostEstimate(
        flops=2 * rows * Dc * D + 8 * rows * D,
        transcendentals=rows,
        bytes_accessed=rows * per_row_traffic + w_bytes,
    )

    # Resident weight: constant index_map, fetched once; single-buffer it.
    try:
        w_spec = pl.BlockSpec((Dc, D), lambda i: (0, 0),
                              pipeline_mode=pl.Buffered(1))
    except TypeError:  # older BlockSpec signature without pipeline_mode
        w_spec = pl.BlockSpec((Dc, D), lambda i: (0, 0))

    out2 = pl.pallas_call(
        _adaln_kernel,
        out_shape=jax.ShapeDtypeStruct((rows, D), x.dtype),
        grid_spec=pltpu.PrefetchScalarGridSpec(
            num_scalar_prefetch=0,
            grid=(grid,),
            in_specs=[
                pl.BlockSpec((tm, D), lambda i: (i, 0)),
                pl.BlockSpec((tm, Dc), lambda i: (i, 0)),
                w_spec,
            ],
            out_specs=pl.BlockSpec((tm, D), lambda i: (i, 0)),
        ),
        compiler_params=pltpu.CompilerParams(
            dimension_semantics=("parallel",),
            vmem_limit_bytes=vmem_limit,
        ),
        cost_estimate=cost,
    )(x2, c2, weight_t)

    return out2.reshape(B, S, D)


def _reference(x, condition, weight_t):
    xf = x.astype(jnp.float32)
    mean = jnp.mean(xf, axis=-1, keepdims=True)
    var = jnp.mean((xf - mean) ** 2, axis=-1, keepdims=True)
    normed = (xf - mean) / jnp.sqrt(var + EPS)
    gamma = condition.astype(jnp.float32) @ weight_t.astype(jnp.float32)
    return (normed * (gamma + 1.0)).astype(x.dtype)


if __name__ == "__main__":
    # Small but lane-dense shapes: rows = B*S = 512 -> 2 grid steps.
    B, S, D = 2, 256, 128
    Dc = D  # dim_condition defaults to dim

    key = jax.random.PRNGKey(0)
    kx, kc, kw = jax.random.split(key, 3)
    x = jax.random.normal(kx, (B, S, D), dtype=jnp.float32)
    condition = jax.random.normal(kc, (B, S, Dc), dtype=jnp.float32)

    # Case 1: module init (zero weight -> gamma = 0 -> out == layernorm(x)).
    w_zero = jnp.zeros((Dc, D), dtype=jnp.float32)
    out = jax.block_until_ready(adaptive_layer_norm(x, condition, w_zero))
    ref = _reference(x, condition, w_zero)
    assert jnp.allclose(out, ref, atol=1e-5, rtol=1e-5), "mismatch (zero weight)"

    # Case 2a: non-zero weight, f32 matmul path (tight tolerance).
    w_rand = 0.02 * jax.random.normal(kw, (Dc, D), dtype=jnp.float32)
    out = jax.block_until_ready(
        adaptive_layer_norm(x, condition, w_rand, bf16_matmul=False))
    ref = _reference(x, condition, w_rand)
    assert jnp.allclose(out, ref, atol=1e-4, rtol=1e-4), "mismatch (f32 matmul)"

    # Case 2b: non-zero weight, bf16 MXU operands (looser tolerance: bf16 gamma).
    out = jax.block_until_ready(adaptive_layer_norm(x, condition, w_rand))
    assert jnp.allclose(out, ref, atol=1e-2, rtol=1e-2), "mismatch (bf16 matmul)"

    # Case 3: rows not divisible by the tile (partial last block, no wrapper pad).
    xs, cs = x[:, : S - 3], condition[:, : S - 3]
    out = jax.block_until_ready(adaptive_layer_norm(xs, cs, w_rand))
    ref = _reference(xs, cs, w_rand)
    assert jnp.allclose(out, ref, atol=1e-2, rtol=1e-2), "mismatch (ragged rows)"

    print("KERNEL_OK")
</pallas_src>

<mosaic_0001>
module attributes {stable_mosaic.version = 11 : i64} {
  func.func @_adaln_kernel(%arg0: i32, %arg1: memref<256x128xf32, #tpu.memory_space<vmem>>, %arg2: memref<256x128xf32, #tpu.memory_space<vmem>>, %arg3: memref<128x128xbf16, #tpu.memory_space<vmem>>, %arg4: memref<256x128xf32, #tpu.memory_space<vmem>>) attributes {dimension_semantics = [#tpu.dimension_semantics<parallel>], iteration_bounds = array<i64: 2>, scalar_prefetch = 0 : i64, scratch_operands = 0 : i64, tpu.core_type = #tpu.core_type<tc>, window_params = [{transform_indices = @transform_0, window_bounds = array<i64: 256, 128>}, {transform_indices = @transform_1, window_bounds = array<i64: 256, 128>}, {pipeline_mode = #tpu.pipeline_mode<synchronous>, transform_indices = @transform_2, window_bounds = array<i64: 128, 128>}, {transform_indices = @transform_3, window_bounds = array<i64: 256, 128>}]} {
    %c0 = arith.constant 0 : index
    %c0_0 = arith.constant 0 : index
    %0 = vector.load %arg1[%c0, %c0_0] : memref<256x128xf32, #tpu.memory_space<vmem>>, vector<256x128xf32>
    %cst = arith.constant dense<0.000000e+00> : vector<256xf32>
    %1 = vector.multi_reduction <add>, %0, %cst [1] : vector<256x128xf32> to vector<256xf32>
    %2 = vector.shape_cast %1 : vector<256xf32> to vector<256x1xf32>
    %cst_1 = arith.constant 1.280000e+02 : f32
    %3 = vector.broadcast %cst_1 : f32 to vector<256x1xf32>
    %4 = arith.divf %2, %3 : vector<256x1xf32>
    %5 = vector.broadcast %4 : vector<256x1xf32> to vector<256x128xf32>
    %6 = arith.subf %0, %5 : vector<256x128xf32>
    %7 = arith.mulf %6, %6 : vector<256x128xf32>
    %cst_2 = arith.constant dense<0.000000e+00> : vector<256xf32>
    %8 = vector.multi_reduction <add>, %7, %cst_2 [1] : vector<256x128xf32> to vector<256xf32>
    %9 = vector.shape_cast %8 : vector<256xf32> to vector<256x1xf32>
    %cst_3 = arith.constant 1.280000e+02 : f32
    %10 = vector.broadcast %cst_3 : f32 to vector<256x1xf32>
    %11 = arith.divf %9, %10 : vector<256x1xf32>
    %cst_4 = arith.constant 9.99999974E-6 : f32
    %12 = vector.broadcast %cst_4 : f32 to vector<256x1xf32>
    %13 = arith.addf %11, %12 : vector<256x1xf32>
    %14 = math.rsqrt %13 : vector<256x1xf32>
    %15 = vector.broadcast %14 : vector<256x1xf32> to vector<256x128xf32>
    %16 = arith.mulf %6, %15 : vector<256x128xf32>
    %c0_5 = arith.constant 0 : index
    %c0_6 = arith.constant 0 : index
    %17 = vector.load %arg2[%c0_5, %c0_6] : memref<256x128xf32, #tpu.memory_space<vmem>>, vector<256x128xf32>
    %18 = arith.truncf %17 : vector<256x128xf32> to vector<256x128xbf16>
    %c0_7 = arith.constant 0 : index
    %c0_8 = arith.constant 0 : index
    %19 = vector.load %arg3[%c0_7, %c0_8] : memref<128x128xbf16, #tpu.memory_space<vmem>>, vector<128x128xbf16>
    %cst_9 = arith.constant dense<0.000000e+00> : vector<256x128xf32>
    %20 = tpu.matmul %18, %19, %cst_9 {dimension_numbers = #tpu.dot_dimension_numbers<[1], [0], [0], [1], [0, 0, 1, 1], [], []>} : vector<256x128xbf16>, vector<128x128xbf16>, vector<256x128xf32> -> vector<256x128xf32>
    %cst_10 = arith.constant 1.000000e+00 : f32
    %21 = vector.broadcast %cst_10 : f32 to vector<256x128xf32>
    %22 = arith.addf %20, %21 : vector<256x128xf32>
    %23 = arith.mulf %16, %22 : vector<256x128xf32>
    %c0_11 = arith.constant 0 : index
    %c0_12 = arith.constant 0 : index
    %24 = vector.load %arg4[%c0_11, %c0_12] : memref<256x128xf32, #tpu.memory_space<vmem>>, vector<256x128xf32>
    tpu.vector_store %arg4[%c0_11, %c0_12], %23 {strides = array<i32>} : memref<256x128xf32, #tpu.memory_space<vmem>>, vector<256x128xf32>,
    return
  }
  func.func @transform_0(%arg0: i32) -> (i32, i32) {
    %c0_i32 = arith.constant 0 : i32
    %c0_i32_0 = arith.constant 0 : i32
    return %arg0, %c0_i32 : i32, i32
  }
  func.func @transform_1(%arg0: i32) -> (i32, i32) {
    %c0_i32 = arith.constant 0 : i32
    %c0_i32_0 = arith.constant 0 : i32
    return %arg0, %c0_i32 : i32, i32
  }
  func.func @transform_2(%arg0: i32) -> (i32, i32) {
    %c0_i32 = arith.constant 0 : i32
    %c0_i32_0 = arith.constant 0 : i32
    %c0_i32_1 = arith.constant 0 : i32
    return %c0_i32, %c0_i32_0 : i32, i32
  }
  func.func @transform_3(%arg0: i32) -> (i32, i32) {
    %c0_i32 = arith.constant 0 : i32
    %c0_i32_0 = arith.constant 0 : i32
    return %arg0, %c0_i32 : i32, i32
  }
}

</mosaic_0001>

<llo_original>
// kernel: tpu_custom_call.1
$region0: #{tpu_custom_call.1}
  #allocation0 [shape = 'u32[]', space=smem, size = 0x4, offset = 0x4, fixed_abs, tag = 'smem constant byte address 0x4 - core index']
  #allocation1 [shape = 'u32[144,128]{1,0:T(1,128)}', space=vmem, size = 0x12000, scoped, tag = 'internal scratch']
  %s0 = inlined_call_operand.hbm [shape: f32[512,128], index: 0, kind: input, shape index: {}]
  %s1 = inlined_call_operand.hbm [shape: f32[512,128], index: 1, kind: input, shape index: {}]
  %s2 = inlined_call_operand.hbm [shape: bf16[128,128], index: 2, kind: input, shape index: {}]
  %s3 = inlined_call_operand.hbm [shape: f32[512,128], index: 3, kind: output, shape index: {}]
  %s4 = sld [smem:[#allocation0]]
  $region57: #{tpu_custom_call.1} parent=0
    _
  %s6 = ssub.s32 1, %s4
  %s7 = scalar_select 0, %s6, %s4
  $region1: #{tpu_custom_call.1} parent=0
    #allocation2 [shape = 'u8[262144]{0}', space=vmem, size = 0x40000, scoped, tag = 'input window, operand 0']
    #allocation3 [shape = 's32[2]{0}', space=sflag, size = 0x8, scoped, tag = 'scoped memory for tpu_custom_call.1']
    #allocation4 [shape = 's32[2]{0}', space=sflag, size = 0x8, scoped, tag = 'scoped memory for tpu_custom_call.1']
    #allocation5 [shape = 'u8[262144]{0}', space=vmem, size = 0x40000, scoped, tag = 'input window, operand 1']
    #allocation6 [shape = 's32[2]{0}', space=sflag, size = 0x8, scoped, tag = 'scoped memory for tpu_custom_call.1']
    #allocation7 [shape = 'u8[32768]{0}', space=vmem, size = 0x8000, scoped, tag = 'input window, operand 2, single buffered']
    #allocation8 [shape = 'u8[262144]{0}', space=vmem, size = 0x40000, scoped, tag = 'output window, operand 0']
    %8 = vsyncpa [#allocation3], 0
    %s9 = scalar_lea.sflag [#allocation3], 1
    %10 = vsyncpa %s9, 0
    %11 = vsyncpa [#allocation6], 0
    %s12 = scalar_lea.sflag [#allocation6], 1
    %13 = vsyncpa %s12, 0
    %14 = vsyncpa [#allocation4], 0
    %s15 = scalar_lea.sflag [#allocation4], 1
    %16 = vsyncpa %s15, 0
    loop: start=0, step=1, limit=4
    $region2: #{tpu_custom_call.1} parent=1 // loop_pre_header
      _
    $region3: #{tpu_custom_call.1} parent=1 // loop_header
      %s18 = sphi 0, %s22
      %p19 = scmp.ge.s32.totalorder %s18, 4
      %s28 = sphi 0, %s30
      %s31 = sphi 0, %s28
      %s32 = sphi 0, %s31
      %s48 = sphi 0, %s32
      %s54 = sphi 0, %s56
      %s57 = sphi 0, %s54
      %s58 = sphi 0, %s57
      %s74 = sphi 0, %s58
      %s78 = sphi 0, %s78
      %s80 = sphi 0, %s78
      %s81 = sphi 0, %s80
      %s95 = sphi 0, %s81
      %s101 = sphi 0, %s103
      %s104 = sphi 0, %s101
      %s105 = sphi 0, %s104
      %s121 = sphi 0, %s105
    $region4: #{tpu_custom_call.1} parent=1 // loop_header_branch
      %21 = sbr.rel (%p19) target = $region8
    $region5: #{tpu_custom_call.1} parent=1 // loop_body
      %s23 = ssub.s32 %s18, 1
      %s24 = ssub.s32 %s18, 2
      %s25 = sadd.s32 %s18, 1
      %s26 = ssub.s32 %s18, %s25
      %p27 = scmp.eq.s32.totalorder %s26, 0
      %s29 = sadd.s32 %s28, 1
      %s30 = scalar_select %p27, %s28, %s29
      %p33 = pneg %p27
      %p34 = scmp.eq.s32.totalorder %s18, 1
      %p35 = por %p33, %p34
      %p36 = scmp.ne.s32.totalorder %s28, %s31
      %p37 = scmp.eq.s32.totalorder %s18, 0
      %p38 = por %p36, %p37
      %p39 = scmp.ne.s32.totalorder %s28, %s31
      %p40 = scmp.eq.s32.totalorder %s23, 1
      %p41 = por %p39, %p40
      %p42 = scmp.ne.s32.totalorder %s31, %s32
      %p43 = scmp.eq.s32.totalorder %s23, 0
      %p44 = por %p42, %p43
      %p45 = scmp.ne.s32.totalorder %s31, %s32
      %p46 = scmp.eq.s32.totalorder %s24, 1
      %p47 = por %p45, %p46
      %p49 = scmp.ne.s32.totalorder %s32, %s48
      %p50 = scmp.eq.s32.totalorder %s24, 0
      %p51 = por %p49, %p50
      %s52 = ssub.s32 %s18, %s25
      %p53 = scmp.eq.s32.totalorder %s52, 0
      %s55 = sadd.s32 %s54, 1
      %s56 = scalar_select %p53, %s54, %s55
      %p59 = pneg %p53
      %p60 = scmp.eq.s32.totalorder %s18, 1
      %p61 = por %p59, %p60
      %p62 = scmp.ne.s32.totalorder %s54, %s57
      %p63 = scmp.eq.s32.totalorder %s18, 0
      %p64 = por %p62, %p63
      %p65 = scmp.ne.s32.totalorder %s54, %s57
      %p66 = scmp.eq.s32.totalorder %s23, 1
      %p67 = por %p65, %p66
      %p68 = scmp.ne.s32.totalorder %s57, %s58
      %p69 = scmp.eq.s32.totalorder %s23, 0
      %p70 = por %p68, %p69
      %p71 = scmp.ne.s32.totalorder %s57, %s58
      %p72 = scmp.eq.s32.totalorder %s24, 1
      %p73 = por %p71, %p72
      %p75 = scmp.ne.s32.totalorder %s58, %s74
      %p76 = scmp.eq.s32.totalorder %s24, 0
      %p77 = por %p75, %p76
      %s79 = sadd.s32 %s78, 1
      %p82 = scmp.eq.s32.totalorder %s18, 1
      %p83 = scmp.ne.s32.totalorder %s78, %s80
      %p84 = scmp.eq.s32.totalorder %s18, 0
      %p85 = por %p83, %p84
      %p86 = scmp.ne.s32.totalorder %s78, %s80
      %p87 = scmp.eq.s32.totalorder %s23, 1
      %p88 = por %p86, %p87
      %p89 = scmp.ne.s32.totalorder %s80, %s81
      %p90 = scmp.eq.s32.totalorder %s23, 0
      %p91 = por %p89, %p90
      %p92 = scmp.ne.s32.totalorder %s80, %s81
      %p93 = scmp.eq.s32.totalorder %s24, 1
      %p94 = por %p92, %p93
      %p96 = scmp.ne.s32.totalorder %s81, %s95
      %p97 = scmp.eq.s32.totalorder %s24, 0
      %p98 = por %p96, %p97
      %s99 = ssub.s32 %s18, %s25
      %p100 = scmp.eq.s32.totalorder %s99, 0
      %s102 = sadd.s32 %s101, 1
      %s103 = scalar_select %p100, %s101, %s102
      %p106 = pneg %p100
      %p107 = scmp.eq.s32.totalorder %s18, 1
      %p108 = por %p106, %p107
      %p109 = scmp.ne.s32.totalorder %s101, %s104
      %p110 = scmp.eq.s32.totalorder %s18, 0
      %p111 = por %p109, %p110
      %p112 = scmp.ne.s32.totalorder %s101, %s104
      %p113 = scmp.eq.s32.totalorder %s23, 1
      %p114 = por %p112, %p113
      %p115 = scmp.ne.s32.totalorder %s104, %s105
      %p116 = scmp.eq.s32.totalorder %s23, 0
      %p117 = por %p115, %p116
      %p118 = scmp.ne.s32.totalorder %s104, %s105
      %p119 = scmp.eq.s32.totalorder %s24, 1
      %p120 = por %p118, %p119
      %p122 = scmp.ne.s32.totalorder %s105, %s121
      %p123 = scmp.eq.s32.totalorder %s24, 0
      %p124 = por %p122, %p123
      %p125 = scmp.le.s32.totalorder 1, %s18
      %p126 = scmp.lt.s32.totalorder %s18, 3
      %p127 = pnand %p125, %p126
      %p128 = pneg %p127
      // Predicated region
      $region9: #{tpu_custom_call.1} parent=5 // pred_check
        _
      $region10: #{tpu_custom_call.1} parent=5 // pred_check_branch
        %130 = sbr.rel (%p127) target = $region12
      $region11: #{tpu_custom_call.1} parent=5 // pred_region
        %s131 = ssub.s32 %s18, 1
        // Predicated region
        $region13: #{tpu_custom_call.1} parent=11 // pred_check
          %p132 = pneg %p91
        $region14: #{tpu_custom_call.1} parent=11 // pred_check_branch
          %134 = sbr.rel (%p132) target = $region16
        $region15: #{tpu_custom_call.1} parent=11 // pred_region
          %s136 = ssub.s32 1024, 1024
          %137 = vsyncadd [#allocation6], %s136
          %s138 = sshll.u32 [#allocation7], 4
          %s139 = int_to_ptr.vmem [resolvable:$true] %s138
          %144 = dma.hbm_to_vmem [thread:$0]  %s2, 1024, %s139, [#allocation6], 64, 64, 4
        $region16: #{tpu_custom_call.1} parent=11 // pred_fallthru
          _
      $region12: #{tpu_custom_call.1} parent=5 // pred_fallthru
        _
      %p145 = scmp.lt.s32.totalorder %s18, 2
      // Predicated region
      $region17: #{tpu_custom_call.1} parent=5 // pred_check
        %p146 = pneg %p145
      $region18: #{tpu_custom_call.1} parent=5 // pred_check_branch
        %148 = sbr.rel (%p146) target = $region20
      $region19: #{tpu_custom_call.1} parent=5 // pred_region
        // Predicated region
        $region21: #{tpu_custom_call.1} parent=19 // pred_check
          %p149 = pneg %p38
        $region22: #{tpu_custom_call.1} parent=19 // pred_check_branch
          %151 = sbr.rel (%p149) target = $region24
        $region23: #{tpu_custom_call.1} parent=19 // pred_region
          %s152 = sand.u32 %s28, 1
          %s153 = scalar_lea.sflag [#allocation3], %s152
          %s154 = sand.u32 %s28, 1
          %s155 = smul.addr %s154, 256
          %s156 = scalar_lea.vmem [#allocation2], %s155
          %s157 = smul.u32 32, %s18
          %s159 = ssub.s32 4096, 4096
          %160 = vsyncadd %s153, %s159
          %s161 = smul.addr %s157, 128
          %s162 = scalar_lea.hbm %s0, %s161
          %s163 = sshll.u32 %s156, 4
          %s164 = int_to_ptr.vmem [resolvable:$true] %s163
          %169 = dma.hbm_to_vmem [thread:$0]  %s162, 4096, %s164, %s153, 128, 128, 8
        $region24: #{tpu_custom_call.1} parent=19 // pred_fallthru
          _
        // Predicated region
        $region25: #{tpu_custom_call.1} parent=19 // pred_check
          %p170 = pneg %p64
        $region26: #{tpu_custom_call.1} parent=19 // pred_check_branch
          %172 = sbr.rel (%p170) target = $region28
        $region27: #{tpu_custom_call.1} parent=19 // pred_region
          %s173 = sand.u32 %s18, 1
          %s174 = scalar_lea.sflag [#allocation6], %s173
          %s175 = sand.u32 %s54, 1
          %s176 = smul.addr %s175, 256
          %s177 = scalar_lea.vmem [#allocation5], %s176
          %s178 = smul.u32 32, %s18
          %s180 = ssub.s32 4096, 4096
          %181 = vsyncadd %s174, %s180
          %s182 = smul.addr %s178, 128
          %s183 = scalar_lea.hbm %s1, %s182
          %s184 = sshll.u32 %s177, 4
          %s185 = int_to_ptr.vmem [resolvable:$true] %s184
          %190 = dma.hbm_to_vmem [thread:$0]  %s183, 4096, %s185, %s174, 128, 128, 8
        $region28: #{tpu_custom_call.1} parent=19 // pred_fallthru
          _
      $region20: #{tpu_custom_call.1} parent=5 // pred_fallthru
        _
      %p191 = scmp.le.s32.totalorder 1, %s18
      %p192 = scmp.lt.s32.totalorder %s18, 3
      %p193 = pnand %p191, %p192
      %p194 = pneg %p193
      // Predicated region
      $region29: #{tpu_custom_call.1} parent=5 // pred_check
        _
      $region30: #{tpu_custom_call.1} parent=5 // pred_check_branch
        %196 = sbr.rel (%p193) target = $region32
      $region31: #{tpu_custom_call.1} parent=5 // pred_region
        %s197 = ssub.s32 %s18, 1
        %s198 = sand.u32 %s31, 1
        %s199 = scalar_lea.sflag [#allocation3], %s198
        %s200 = sand.u32 %s31, 1
        %s201 = smul.addr %s200, 256
        %s202 = scalar_lea.vmem [#allocation2], %s201
        // Predicated region
        $region33: #{tpu_custom_call.1} parent=31 // pred_check
          %p203 = pneg %p44
        $region34: #{tpu_custom_call.1} parent=31 // pred_check_branch
          %205 = sbr.rel (%p203) target = $region36
        $region35: #{tpu_custom_call.1} parent=31 // pred_region
          %206 = dma.done %s199, 4096
        $region36: #{tpu_custom_call.1} parent=31 // pred_fallthru
          _
        %s207 = sand.u32 %s23, 1
        %s208 = scalar_lea.sflag [#allocation6], %s207
        %s209 = sand.u32 %s57, 1
        %s210 = smul.addr %s209, 256
        %s211 = scalar_lea.vmem [#allocation5], %s210
        // Predicated region
        $region37: #{tpu_custom_call.1} parent=31 // pred_check
          %p212 = pneg %p70
        $region38: #{tpu_custom_call.1} parent=31 // pred_check_branch
          %214 = sbr.rel (%p212) target = $region40
        $region39: #{tpu_custom_call.1} parent=31 // pred_region
          %215 = dma.done %s208, 4096
        $region40: #{tpu_custom_call.1} parent=31 // pred_fallthru
          _
        // Predicated region
        $region41: #{tpu_custom_call.1} parent=31 // pred_check
          %p216 = pneg %p91
        $region42: #{tpu_custom_call.1} parent=31 // pred_check_branch
          %218 = sbr.rel (%p216) target = $region44
        $region43: #{tpu_custom_call.1} parent=31 // pred_region
          %219 = dma.done [#allocation6], 1024
        $region44: #{tpu_custom_call.1} parent=31 // pred_fallthru
          _
        %s220 = sand.u32 %s31, 1
        %s221 = scalar_lea.sflag [#allocation3], %s220
        %s222 = sand.u32 %s31, 1
        %s223 = smul.addr %s222, 256
        %s224 = scalar_lea.vmem [#allocation2], %s223
        %p225 = pneg %p44
        %p226 = pneg %p41
        %s227 = sand.u32 %s23, 1
        %s228 = scalar_lea.sflag [#allocation6], %s227
        %s229 = sand.u32 %s57, 1
        %s230 = smul.addr %s229, 256
        %s231 = scalar_lea.vmem [#allocation5], %s230
        %p232 = pneg %p70
        %p233 = pneg %p67
        %p234 = pneg %p91
        %p235 = pneg %p88
        %p236 = pneg %p117
        %p237 = pneg %p114
        %s238 = sand.u32 %s104, 1
        %s239 = scalar_lea.sflag [#allocation4], %s238
        %s240 = sand.u32 %s104, 1
        %s241 = smul.addr %s240, 256
        %s242 = scalar_lea.vmem [#allocation8], %s241
        %s243 = smul.u32 32, %s23
        %s244 = smul.u32 32, %s23
        %s245 = smul.u32 32, %s23
        %v247 = vld [vmem:[%s202] sm:$0xff]
        %v248 = vld [vmem:[%s202 + $0x8] sm:$0xff]
        %v249 = vld [vmem:[%s202 + $0x10] sm:$0xff]
        %v250 = vld [vmem:[%s202 + $0x18] sm:$0xff]
        %v251 = vld [vmem:[%s202 + $0x20] sm:$0xff]
        %v252 = vld [vmem:[%s202 + $0x28] sm:$0xff]
        %v253 = vld [vmem:[%s202 + $0x30] sm:$0xff]
        %v254 = vld [vmem:[%s202 + $0x38] sm:$0xff]
        %v255 = vld [vmem:[%s202 + $0x40] sm:$0xff]
        %v256 = vld [vmem:[%s202 + $0x48] sm:$0xff]
        %v257 = vld [vmem:[%s202 + $0x50] sm:$0xff]
        %v258 = vld [vmem:[%s202 + $0x58] sm:$0xff]
        %v259 = vld [vmem:[%s202 + $0x60] sm:$0xff]
        %v260 = vld [vmem:[%s202 + $0x68] sm:$0xff]
        %v261 = vld [vmem:[%s202 + $0x70] sm:$0xff]
        %v262 = vld [vmem:[%s202 + $0x78] sm:$0xff]
        %v263 = vld [vmem:[%s202 + $0x80] sm:$0xff]
        %v264 = vld [vmem:[%s202 + $0x88] sm:$0xff]
        %v265 = vld [vmem:[%s202 + $0x90] sm:$0xff]
        %v266 = vld [vmem:[%s202 + $0x98] sm:$0xff]
        %v267 = vld [vmem:[%s202 + $0xa0] sm:$0xff]
        %v268 = vld [vmem:[%s202 + $0xa8] sm:$0xff]
        %v269 = vld [vmem:[%s202 + $0xb0] sm:$0xff]
        %v270 = vld [vmem:[%s202 + $0xb8] sm:$0xff]
        %v271 = vld [vmem:[%s202 + $0xc0] sm:$0xff]
        %v272 = vld [vmem:[%s202 + $0xc8] sm:$0xff]
        %v273 = vld [vmem:[%s202 + $0xd0] sm:$0xff]
        %v274 = vld [vmem:[%s202 + $0xd8] sm:$0xff]
        %v275 = vld [vmem:[%s202 + $0xe0] sm:$0xff]
        %v276 = vld [vmem:[%s202 + $0xe8] sm:$0xff]
        %v277 = vld [vmem:[%s202 + $0xf0] sm:$0xff]
        %v278 = vld [vmem:[%s202 + $0xf8] sm:$0xff]
        %279 = vadd.xlane.f32.xlu0 %v247
        %v280 = vpop.xlane.xlu0 %279
        %281 = vadd.xlane.f32.xlu0 %v248
        %v282 = vpop.xlane.xlu0 %281
        %283 = vadd.xlane.f32.xlu0 %v249
        %v284 = vpop.xlane.xlu0 %283
        %285 = vadd.xlane.f32.xlu0 %v250
        %v286 = vpop.xlane.xlu0 %285
        %287 = vadd.xlane.f32.xlu0 %v251
        %v288 = vpop.xlane.xlu0 %287
        %289 = vadd.xlane.f32.xlu0 %v252
        %v290 = vpop.xlane.xlu0 %289
        %291 = vadd.xlane.f32.xlu0 %v253
        %v292 = vpop.xlane.xlu0 %291
        %293 = vadd.xlane.f32.xlu0 %v254
        %v294 = vpop.xlane.xlu0 %293
        %295 = vadd.xlane.f32.xlu0 %v255
        %v296 = vpop.xlane.xlu0 %295
        %297 = vadd.xlane.f32.xlu0 %v256
        %v298 = vpop.xlane.xlu0 %297
        %299 = vadd.xlane.f32.xlu0 %v257
        %v300 = vpop.xlane.xlu0 %299
        %301 = vadd.xlane.f32.xlu0 %v258
        %v302 = vpop.xlane.xlu0 %301
        %303 = vadd.xlane.f32.xlu0 %v259
        %v304 = vpop.xlane.xlu0 %303
        %305 = vadd.xlane.f32.xlu0 %v260
        %v306 = vpop.xlane.xlu0 %305
        %307 = vadd.xlane.f32.xlu0 %v261
        %v308 = vpop.xlane.xlu0 %307
        %309 = vadd.xlane.f32.xlu0 %v262
        %v310 = vpop.xlane.xlu0 %309
        %311 = vadd.xlane.f32.xlu0 %v263
        %v312 = vpop.xlane.xlu0 %311
        %313 = vadd.xlane.f32.xlu0 %v264
        %v314 = vpop.xlane.xlu0 %313
        %315 = vadd.xlane.f32.xlu0 %v265
        %v316 = vpop.xlane.xlu0 %315
        %317 = vadd.xlane.f32.xlu0 %v266
        %v318 = vpop.xlane.xlu0 %317
        %319 = vadd.xlane.f32.xlu0 %v267
        %v320 = vpop.xlane.xlu0 %319
        %321 = vadd.xlane.f32.xlu0 %v268
        %v322 = vpop.xlane.xlu0 %321
        %323 = vadd.xlane.f32.xlu0 %v269
        %v324 = vpop.xlane.xlu0 %323
        %325 = vadd.xlane.f32.xlu0 %v270
        %v326 = vpop.xlane.xlu0 %325
        %327 = vadd.xlane.f32.xlu0 %v271
        %v328 = vpop.xlane.xlu0 %327
        %329 = vadd.xlane.f32.xlu0 %v272
        %v330 = vpop.xlane.xlu0 %329
        %331 = vadd.xlane.f32.xlu0 %v273
        %v332 = vpop.xlane.xlu0 %331
        %333 = vadd.xlane.f32.xlu0 %v274
        %v334 = vpop.xlane.xlu0 %333
        %335 = vadd.xlane.f32.xlu0 %v275
        %v336 = vpop.xlane.xlu0 %335
        %337 = vadd.xlane.f32.xlu0 %v276
        %v338 = vpop.xlane.xlu0 %337
        %339 = vadd.xlane.f32.xlu0 %v277
        %v340 = vpop.xlane.xlu0 %339
        %341 = vadd.xlane.f32.xlu0 %v278
        %v342 = vpop.xlane.xlu0 %341
        %v343 = vrcp.pop 128.0
        %v344 = vmul.f32 %v280, %v343
        %v345 = vmul.f32 %v282, %v343
        %v346 = vmul.f32 %v284, %v343
        %v347 = vmul.f32 %v286, %v343
        %v348 = vmul.f32 %v288, %v343
        %v349 = vmul.f32 %v290, %v343
        %v350 = vmul.f32 %v292, %v343
        %v351 = vmul.f32 %v294, %v343
        %v352 = vmul.f32 %v296, %v343
        %v353 = vmul.f32 %v298, %v343
        %v354 = vmul.f32 %v300, %v343
        %v355 = vmul.f32 %v302, %v343
        %v356 = vmul.f32 %v304, %v343
        %v357 = vmul.f32 %v306, %v343
        %v358 = vmul.f32 %v308, %v343
        %v359 = vmul.f32 %v310, %v343
        %v360 = vmul.f32 %v312, %v343
        %v361 = vmul.f32 %v314, %v343
        %v362 = vmul.f32 %v316, %v343
        %v363 = vmul.f32 %v318, %v343
        %v364 = vmul.f32 %v320, %v343
        %v365 = vmul.f32 %v322, %v343
        %v366 = vmul.f32 %v324, %v343
        %v367 = vmul.f32 %v326, %v343
        %v368 = vmul.f32 %v328, %v343
        %v369 = vmul.f32 %v330, %v343
        %v370 = vmul.f32 %v332, %v343
        %v371 = vmul.f32 %v334, %v343
        %v372 = vmul.f32 %v336, %v343
        %v373 = vmul.f32 %v338, %v343
        %v374 = vmul.f32 %v340, %v343
        %v375 = vmul.f32 %v342, %v343
        %v376 = vsub.f32 %v247, %v344
        %v377 = vsub.f32 %v248, %v345
        %v378 = vsub.f32 %v249, %v346
        %v379 = vsub.f32 %v250, %v347
        %v380 = vsub.f32 %v251, %v348
        %v381 = vsub.f32 %v252, %v349
        %v382 = vsub.f32 %v253, %v350
        %v383 = vsub.f32 %v254, %v351
        %v384 = vsub.f32 %v255, %v352
        %v385 = vsub.f32 %v256, %v353
        %v386 = vsub.f32 %v257, %v354
        %v387 = vsub.f32 %v258, %v355
        %v388 = vsub.f32 %v259, %v356
        %v389 = vsub.f32 %v260, %v357
        %v390 = vsub.f32 %v261, %v358
        %v391 = vsub.f32 %v262, %v359
        %v392 = vsub.f32 %v263, %v360
        %v393 = vsub.f32 %v264, %v361
        %v394 = vsub.f32 %v265, %v362
        %v395 = vsub.f32 %v266, %v363
        %v396 = vsub.f32 %v267, %v364
        %v397 = vsub.f32 %v268, %v365
        %v398 = vsub.f32 %v269, %v366
        %v399 = vsub.f32 %v270, %v367
        %v400 = vsub.f32 %v271, %v368
        %v401 = vsub.f32 %v272, %v369
        %v402 = vsub.f32 %v273, %v370
        %v403 = vsub.f32 %v274, %v371
        %v404 = vsub.f32 %v275, %v372
        %v405 = vsub.f32 %v276, %v373
        %v406 = vsub.f32 %v277, %v374
        %v407 = vsub.f32 %v278, %v375
        %v408 = vmul.f32 %v376, %v376
        %v409 = vmul.f32 %v377, %v377
        %v410 = vmul.f32 %v378, %v378
        %v411 = vmul.f32 %v379, %v379
        %v412 = vmul.f32 %v380, %v380
        %v413 = vmul.f32 %v381, %v381
        %v414 = vmul.f32 %v382, %v382
        %v415 = vmul.f32 %v383, %v383
        %v416 = vmul.f32 %v384, %v384
        %v417 = vmul.f32 %v385, %v385
        %v418 = vmul.f32 %v386, %v386
        %v419 = vmul.f32 %v387, %v387
        %v420 = vmul.f32 %v388, %v388
        %v421 = vmul.f32 %v389, %v389
        %v422 = vmul.f32 %v390, %v390
        %v423 = vmul.f32 %v391, %v391
        %v424 = vmul.f32 %v392, %v392
        %v425 = vmul.f32 %v393, %v393
        %v426 = vmul.f32 %v394, %v394
        %v427 = vmul.f32 %v395, %v395
        %v428 = vmul.f32 %v396, %v396
        %v429 = vmul.f32 %v397, %v397
        %v430 = vmul.f32 %v398, %v398
        %v431 = vmul.f32 %v399, %v399
        %v432 = vmul.f32 %v400, %v400
        %v433 = vmul.f32 %v401, %v401
        %v434 = vmul.f32 %v402, %v402
        %v435 = vmul.f32 %v403, %v403
        %v436 = vmul.f32 %v404, %v404
        %v437 = vmul.f32 %v405, %v405
        %v438 = vmul.f32 %v406, %v406
        %v439 = vmul.f32 %v407, %v407
        %440 = vadd.xlane.f32.xlu0 %v408
        %v441 = vpop.xlane.xlu0 %440
        %442 = vadd.xlane.f32.xlu0 %v409
        %v443 = vpop.xlane.xlu0 %442
        %444 = vadd.xlane.f32.xlu0 %v410
        %v445 = vpop.xlane.xlu0 %444
        %446 = vadd.xlane.f32.xlu0 %v411
        %v447 = vpop.xlane.xlu0 %446
        %448 = vadd.xlane.f32.xlu0 %v412
        %v449 = vpop.xlane.xlu0 %448
        %450 = vadd.xlane.f32.xlu0 %v413
        %v451 = vpop.xlane.xlu0 %450
        %452 = vadd.xlane.f32.xlu0 %v414
        %v453 = vpop.xlane.xlu0 %452
        %454 = vadd.xlane.f32.xlu0 %v415
        %v455 = vpop.xlane.xlu0 %454
        %456 = vadd.xlane.f32.xlu0 %v416
        %v457 = vpop.xlane.xlu0 %456
        %458 = vadd.xlane.f32.xlu0 %v417
        %v459 = vpop.xlane.xlu0 %458
        %460 = vadd.xlane.f32.xlu0 %v418
        %v461 = vpop.xlane.xlu0 %460
        %462 = vadd.xlane.f32.xlu0 %v419
        %v463 = vpop.xlane.xlu0 %462
        %464 = vadd.xlane.f32.xlu0 %v420
        %v465 = vpop.xlane.xlu0 %464
        %466 = vadd.xlane.f32.xlu0 %v421
        %v467 = vpop.xlane.xlu0 %466
        %468 = vadd.xlane.f32.xlu0 %v422
        %v469 = vpop.xlane.xlu0 %468
        %470 = vadd.xlane.f32.xlu0 %v423
        %v471 = vpop.xlane.xlu0 %470
        %472 = vadd.xlane.f32.xlu0 %v424
        %v473 = vpop.xlane.xlu0 %472
        %474 = vadd.xlane.f32.xlu0 %v425
        %v475 = vpop.xlane.xlu0 %474
        %476 = vadd.xlane.f32.xlu0 %v426
        %v477 = vpop.xlane.xlu0 %476
        %478 = vadd.xlane.f32.xlu0 %v427
        %v479 = vpop.xlane.xlu0 %478
        %480 = vadd.xlane.f32.xlu0 %v428
        %v481 = vpop.xlane.xlu0 %480
        %482 = vadd.xlane.f32.xlu0 %v429
        %v483 = vpop.xlane.xlu0 %482
        %484 = vadd.xlane.f32.xlu0 %v430
        %v485 = vpop.xlane.xlu0 %484
        %486 = vadd.xlane.f32.xlu0 %v431
        %v487 = vpop.xlane.xlu0 %486
        %488 = vadd.xlane.f32.xlu0 %v432
        %v489 = vpop.xlane.xlu0 %488
        %490 = vadd.xlane.f32.xlu0 %v433
        %v491 = vpop.xlane.xlu0 %490
        %492 = vadd.xlane.f32.xlu0 %v434
        %v493 = vpop.xlane.xlu0 %492
        %494 = vadd.xlane.f32.xlu0 %v435
        %v495 = vpop.xlane.xlu0 %494
        %496 = vadd.xlane.f32.xlu0 %v436
        %v497 = vpop.xlane.xlu0 %496
        %498 = vadd.xlane.f32.xlu0 %v437
        %v499 = vpop.xlane.xlu0 %498
        %500 = vadd.xlane.f32.xlu0 %v438
        %v501 = vpop.xlane.xlu0 %500
        %502 = vadd.xlane.f32.xlu0 %v439
        %v503 = vpop.xlane.xlu0 %502
        %v504 = vmul.f32 %v441, %v343
        %v505 = vmul.f32 %v443, %v343
        %v506 = vmul.f32 %v445, %v343
        %v507 = vmul.f32 %v447, %v343
        %v508 = vmul.f32 %v449, %v343
        %v509 = vmul.f32 %v451, %v343
        %v510 = vmul.f32 %v453, %v343
        %v511 = vmul.f32 %v455, %v343
        %v512 = vmul.f32 %v457, %v343
        %v513 = vmul.f32 %v459, %v343
        %v514 = vmul.f32 %v461, %v343
        %v515 = vmul.f32 %v463, %v343
        %v516 = vmul.f32 %v465, %v343
        %v517 = vmul.f32 %v467, %v343
        %v518 = vmul.f32 %v469, %v343
        %v519 = vmul.f32 %v471, %v343
        %v520 = vmul.f32 %v473, %v343
        %v521 = vmul.f32 %v475, %v343
        %v522 = vmul.f32 %v477, %v343
        %v523 = vmul.f32 %v479, %v343
        %v524 = vmul.f32 %v481, %v343
        %v525 = vmul.f32 %v483, %v343
        %v526 = vmul.f32 %v485, %v343
        %v527 = vmul.f32 %v487, %v343
        %v528 = vmul.f32 %v489, %v343
        %v529 = vmul.f32 %v491, %v343
        %v530 = vmul.f32 %v493, %v343
        %v531 = vmul.f32 %v495, %v343
        %v532 = vmul.f32 %v497, %v343
        %v533 = vmul.f32 %v499, %v343
        %v534 = vmul.f32 %v501, %v343
        %v535 = vmul.f32 %v503, %v343
        %v536 = vadd.f32 %v504, 1e-05
        %v537 = vadd.f32 %v505, 1e-05
        %v538 = vadd.f32 %v506, 1e-05
        %v539 = vadd.f32 %v507, 1e-05
        %v540 = vadd.f32 %v508, 1e-05
        %v541 = vadd.f32 %v509, 1e-05
        %v542 = vadd.f32 %v510, 1e-05
        %v543 = vadd.f32 %v511, 1e-05
        %v544 = vadd.f32 %v512, 1e-05
        %v545 = vadd.f32 %v513, 1e-05
        %v546 = vadd.f32 %v514, 1e-05
        %v547 = vadd.f32 %v515, 1e-05
        %v548 = vadd.f32 %v516, 1e-05
        %v549 = vadd.f32 %v517, 1e-05
        %v550 = vadd.f32 %v518, 1e-05
        %v551 = vadd.f32 %v519, 1e-05
        %v552 = vadd.f32 %v520, 1e-05
        %v553 = vadd.f32 %v521, 1e-05
        %v554 = vadd.f32 %v522, 1e-05
        %v555 = vadd.f32 %v523, 1e-05
        %v556 = vadd.f32 %v524, 1e-05
        %v557 = vadd.f32 %v525, 1e-05
        %v558 = vadd.f32 %v526, 1e-05
        %v559 = vadd.f32 %v527, 1e-05
        %v560 = vadd.f32 %v528, 1e-05
        %v561 = vadd.f32 %v529, 1e-05
        %v562 = vadd.f32 %v530, 1e-05
        %v563 = vadd.f32 %v531, 1e-05
        %v564 = vadd.f32 %v532, 1e-05
        %v565 = vadd.f32 %v533, 1e-05
        %v566 = vadd.f32 %v534, 1e-05
        %v567 = vadd.f32 %v535, 1e-05
        %v568 = vrsqrt.pop %v536
        %v569 = vrsqrt.pop %v537
        %v570 = vrsqrt.pop %v538
        %v571 = vrsqrt.pop %v539
        %v572 = vrsqrt.pop %v540
        %v573 = vrsqrt.pop %v541
        %v574 = vrsqrt.pop %v542
        %v575 = vrsqrt.pop %v543
        %v576 = vrsqrt.pop %v544
        %v577 = vrsqrt.pop %v545
        %v578 = vrsqrt.pop %v546
        %v579 = vrsqrt.pop %v547
        %v580 = vrsqrt.pop %v548
        %v581 = vrsqrt.pop %v549
        %v582 = vrsqrt.pop %v550
        %v583 = vrsqrt.pop %v551
        %v584 = vrsqrt.pop %v552
        %v585 = vrsqrt.pop %v553
        %v586 = vrsqrt.pop %v554
        %v587 = vrsqrt.pop %v555
        %v588 = vrsqrt.pop %v556
        %v589 = vrsqrt.pop %v557
        %v590 = vrsqrt.pop %v558
        %v591 = vrsqrt.pop %v559
        %v592 = vrsqrt.pop %v560
        %v593 = vrsqrt.pop %v561
        %v594 = vrsqrt.pop %v562
        %v595 = vrsqrt.pop %v563
        %v596 = vrsqrt.pop %v564
        %v597 = vrsqrt.pop %v565
        %v598 = vrsqrt.pop %v566
        %v599 = vrsqrt.pop %v567
        %v600 = vmul.f32 %v376, %v568
        %v601 = vmul.f32 %v377, %v569
        %v602 = vmul.f32 %v378, %v570
        %v603 = vmul.f32 %v379, %v571
        %v604 = vmul.f32 %v380, %v572
        %v605 = vmul.f32 %v381, %v573
        %v606 = vmul.f32 %v382, %v574
        %v607 = vmul.f32 %v383, %v575
        %v608 = vmul.f32 %v384, %v576
        %v609 = vmul.f32 %v385, %v577
        %v610 = vmul.f32 %v386, %v578
        %v611 = vmul.f32 %v387, %v579
        %v612 = vmul.f32 %v388, %v580
        %v613 = vmul.f32 %v389, %v581
        %v614 = vmul.f32 %v390, %v582
        %v615 = vmul.f32 %v391, %v583
        %v616 = vmul.f32 %v392, %v584
        %v617 = vmul.f32 %v393, %v585
        %v618 = vmul.f32 %v394, %v586
        %v619 = vmul.f32 %v395, %v587
        %v620 = vmul.f32 %v396, %v588
        %v621 = vmul.f32 %v397, %v589
        %v622 = vmul.f32 %v398, %v590
        %v623 = vmul.f32 %v399, %v591
        %v624 = vmul.f32 %v400, %v592
        %v625 = vmul.f32 %v401, %v593
        %v626 = vmul.f32 %v402, %v594
        %v627 = vmul.f32 %v403, %v595
        %v628 = vmul.f32 %v404, %v596
        %v629 = vmul.f32 %v405, %v597
        %v630 = vmul.f32 %v406, %v598
        %v631 = vmul.f32 %v407, %v599
        %v632 = vld [vmem:[%s211] sm:$0xff]
        %v633 = vld [vmem:[%s211 + $0x8] sm:$0xff]
        %v634 = vld [vmem:[%s211 + $0x10] sm:$0xff]
        %v635 = vld [vmem:[%s211 + $0x18] sm:$0xff]
        %v636 = vld [vmem:[%s211 + $0x20] sm:$0xff]
        %v637 = vld [vmem:[%s211 + $0x28] sm:$0xff]
        %v638 = vld [vmem:[%s211 + $0x30] sm:$0xff]
        %v639 = vld [vmem:[%s211 + $0x38] sm:$0xff]
        %v640 = vld [vmem:[%s211 + $0x40] sm:$0xff]
        %v641 = vld [vmem:[%s211 + $0x48] sm:$0xff]
        %v642 = vld [vmem:[%s211 + $0x50] sm:$0xff]
        %v643 = vld [vmem:[%s211 + $0x58] sm:$0xff]
        %v644 = vld [vmem:[%s211 + $0x60] sm:$0xff]
        %v645 = vld [vmem:[%s211 + $0x68] sm:$0xff]
        %v646 = vld [vmem:[%s211 + $0x70] sm:$0xff]
        %v647 = vld [vmem:[%s211 + $0x78] sm:$0xff]
        %v648 = vld [vmem:[%s211 + $0x80] sm:$0xff]
        %v649 = vld [vmem:[%s211 + $0x88] sm:$0xff]
        %v650 = vld [vmem:[%s211 + $0x90] sm:$0xff]
        %v651 = vld [vmem:[%s211 + $0x98] sm:$0xff]
        %v652 = vld [vmem:[%s211 + $0xa0] sm:$0xff]
        %v653 = vld [vmem:[%s211 + $0xa8] sm:$0xff]
        %v654 = vld [vmem:[%s211 + $0xb0] sm:$0xff]
        %v655 = vld [vmem:[%s211 + $0xb8] sm:$0xff]
        %v656 = vld [vmem:[%s211 + $0xc0] sm:$0xff]
        %v657 = vld [vmem:[%s211 + $0xc8] sm:$0xff]
        %v658 = vld [vmem:[%s211 + $0xd0] sm:$0xff]
        %v659 = vld [vmem:[%s211 + $0xd8] sm:$0xff]
        %v660 = vld [vmem:[%s211 + $0xe0] sm:$0xff]
        %v661 = vld [vmem:[%s211 + $0xe8] sm:$0xff]
        %v662 = vld [vmem:[%s211 + $0xf0] sm:$0xff]
        %v663 = vld [vmem:[%s211 + $0xf8] sm:$0xff]
        %v664 = vpack.c.bf16 %v633, %v632
        %v665 = vpack.c.bf16 %v635, %v634
        %v666 = vpack.c.bf16 %v637, %v636
        %v667 = vpack.c.bf16 %v639, %v638
        %v668 = vpack.c.bf16 %v641, %v640
        %v669 = vpack.c.bf16 %v643, %v642
        %v670 = vpack.c.bf16 %v645, %v644
        %v671 = vpack.c.bf16 %v647, %v646
        %v672 = vpack.c.bf16 %v649, %v648
        %v673 = vpack.c.bf16 %v651, %v650
        %v674 = vpack.c.bf16 %v653, %v652
        %v675 = vpack.c.bf16 %v655, %v654
        %v676 = vpack.c.bf16 %v657, %v656
        %v677 = vpack.c.bf16 %v659, %v658
        %v678 = vpack.c.bf16 %v661, %v660
        %v679 = vpack.c.bf16 %v663, %v662
        %v680 = vld [vmem:[#allocation7] sm:$0xf]
        %v681 = vld [vmem:[#allocation7 + $0x4] sm:$0xf]
        %v682 = vld [vmem:[#allocation7 + $0x8] sm:$0xf]
        %v683 = vld [vmem:[#allocation7 + $0xc] sm:$0xf]
        %v684 = vld [vmem:[#allocation7 + $0x10] sm:$0xf]
        %v685 = vld [vmem:[#allocation7 + $0x14] sm:$0xf]
        %v686 = vld [vmem:[#allocation7 + $0x18] sm:$0xf]
        %v687 = vld [vmem:[#allocation7 + $0x1c] sm:$0xf]
        %v688 = vld [vmem:[#allocation7 + $0x20] sm:$0xf]
        %v689 = vld [vmem:[#allocation7 + $0x24] sm:$0xf]
        %v690 = vld [vmem:[#allocation7 + $0x28] sm:$0xf]
        %v691 = vld [vmem:[#allocation7 + $0x2c] sm:$0xf]
        %v692 = vld [vmem:[#allocation7 + $0x30] sm:$0xf]
        %v693 = vld [vmem:[#allocation7 + $0x34] sm:$0xf]
        %v694 = vld [vmem:[#allocation7 + $0x38] sm:$0xf]
        %v695 = vld [vmem:[#allocation7 + $0x3c] sm:$0xf]
        %v712 = vunpack.c.l.b16 %v680
        %v713 = vunpack.c.l.b16 %v681
        %v714 = vunpack.c.l.b16 %v682
        %v715 = vunpack.c.l.b16 %v683
        %v716 = vunpack.c.l.b16 %v684
        %v717 = vunpack.c.l.b16 %v685
        %v718 = vunpack.c.l.b16 %v686
        %v719 = vunpack.c.l.b16 %v687
        %v720 = vunpack.c.l.b16 %v688
        %v721 = vunpack.c.l.b16 %v689
        %v722 = vunpack.c.l.b16 %v690
        %v723 = vunpack.c.l.b16 %v691
        %v724 = vunpack.c.l.b16 %v692
        %v725 = vunpack.c.l.b16 %v693
        %v726 = vunpack.c.l.b16 %v694
        %v727 = vunpack.c.l.b16 %v695
        %v728 = vpack.c.b16 %v713, %v712
        %v729 = vpack.c.b16 %v715, %v714
        %v730 = vpack.c.b16 %v717, %v716
        %v731 = vpack.c.b16 %v719, %v718
        %v732 = vpack.c.b16 %v721, %v720
        %v733 = vpack.c.b16 %v723, %v722
        %v734 = vpack.c.b16 %v725, %v724
        %v735 = vpack.c.b16 %v727, %v726
        %744 = vmatprep.subr.bf16.mxu0 0
        %745 = vmatpush1.bf16.msra.mxu0 %v728
        %746 = vmatprep.subr.bf16.mxu0 0
        %747 = vmatpush1.bf16.msra.mxu0 %v729
        %748 = vmatprep.subr.bf16.mxu0 0
        %749 = vmatpush1.bf16.msra.mxu0 %v730
        %750 = vmatprep.subr.bf16.mxu0 0
        %751 = vmatpush1.bf16.msra.mxu0 %v731
        %752 = vmatprep.subr.bf16.mxu0 0
        %753 = vmatpush1.bf16.msra.mxu0 %v732
        %754 = vmatprep.subr.bf16.mxu0 0
        %755 = vmatpush1.bf16.msra.mxu0 %v733
        %756 = vmatprep.subr.bf16.mxu0 0
        %757 = vmatpush1.bf16.msra.mxu0 %v734
        %758 = vmatprep.subr.bf16.mxu0 0
        %759 = vmatpush1.bf16.msra.mxu0 %v735
        %760 = vmatprep.subr.bf16.mxu0 0
        %761 = vmatpush1.bf16.msra.mxu0 0
        %762 = vmatprep.subr.bf16.mxu0 0
        %763 = vmatpush1.bf16.msra.mxu0 0
        %764 = vmatprep.subr.bf16.mxu0 0
        %765 = vmatpush1.bf16.msra.mxu0 0
        %766 = vmatprep.subr.bf16.mxu0 0
        %767 = vmatpush1.bf16.msra.mxu0 0
        %768 = vmatprep.subr.bf16.mxu0 0
        %769 = vmatpush1.bf16.msra.mxu0 0
        %770 = vmatprep.subr.bf16.mxu0 0
        %771 = vmatpush1.bf16.msra.mxu0 0
        %772 = vmatprep.subr.bf16.mxu0 0
        %773 = vmatpush1.bf16.msra.mxu0 0
        %774 = vmatprep.subr.bf16.mxu0 0
        %775 = vmatpush1.bf16.msra.mxu0 0
        %776 = vmatprep.mubr.bf16.mxu0 0
        %777 = vmatmul.mubr.bf16.gmra.mrb[0].mxu0 %v664
        %v778 = vpop.f32.mrb[0].mxu0
        %v779 = vadd.f32 1.0, %v778
        %v780 = vpop.f32.mrb[0].mxu0
        %v781 = vpop.f32.mrb[0].mxu0
        %v782 = vadd.f32 1.0, %v781
        %v783 = vpop.f32.mrb[0].mxu0
        %784 = vmatprep.mubr.bf16.mxu0 0
        %785 = vmatmul.mubr.bf16.gmra.mrb[0].mxu0 %v665
        %v786 = vpop.f32.mrb[0].mxu0
        %v787 = vadd.f32 1.0, %v786
        %v788 = vpop.f32.mrb[0].mxu0
        %v789 = vpop.f32.mrb[0].mxu0
        %v790 = vadd.f32 1.0, %v789
        %v791 = vpop.f32.mrb[0].mxu0
        %792 = vmatprep.mubr.bf16.mxu0 0
        %793 = vmatmul.mubr.bf16.gmra.mrb[0].mxu0 %v666
        %v794 = vpop.f32.mrb[0].mxu0
        %v795 = vadd.f32 1.0, %v794
        %v796 = vpop.f32.mrb[0].mxu0
        %v797 = vpop.f32.mrb[0].mxu0
        %v798 = vadd.f32 1.0, %v797
        %v799 = vpop.f32.mrb[0].mxu0
        %800 = vmatprep.mubr.bf16.mxu0 0
        %801 = vmatmul.mubr.bf16.gmra.mrb[0].mxu0 %v667
        %v802 = vpop.f32.mrb[0].mxu0
        %v803 = vadd.f32 1.0, %v802
        %v804 = vpop.f32.mrb[0].mxu0
        %v805 = vpop.f32.mrb[0].mxu0
        %v806 = vadd.f32 1.0, %v805
        %v807 = vpop.f32.mrb[0].mxu0
        %808 = vmatprep.mubr.bf16.mxu0 0
        %809 = vmatmul.mubr.bf16.gmra.mrb[0].mxu0 %v668
        %v810 = vpop.f32.mrb[0].mxu0
        %v811 = vadd.f32 1.0, %v810
        %v812 = vpop.f32.mrb[0].mxu0
        %v813 = vpop.f32.mrb[0].mxu0
        %v814 = vadd.f32 1.0, %v813
        %v815 = vpop.f32.mrb[0].mxu0
        %816 = vmatprep.mubr.bf16.mxu0 0
        %817 = vmatmul.mubr.bf16.gmra.mrb[0].mxu0 %v669
        %v818 = vpop.f32.mrb[0].mxu0
        %v819 = vadd.f32 1.0, %v818
        %v820 = vpop.f32.mrb[0].mxu0
        %v821 = vpop.f32.mrb[0].mxu0
        %v822 = vadd.f32 1.0, %v821
        %v823 = vpop.f32.mrb[0].mxu0
        %824 = vmatprep.mubr.bf16.mxu0 0
        %825 = vmatmul.mubr.bf16.gmra.mrb[0].mxu0 %v670
        %v826 = vpop.f32.mrb[0].mxu0
        %v827 = vadd.f32 1.0, %v826
        %v828 = vpop.f32.mrb[0].mxu0
        %v829 = vpop.f32.mrb[0].mxu0
        %v830 = vadd.f32 1.0, %v829
        %v831 = vpop.f32.mrb[0].mxu0
        %832 = vmatprep.mubr.bf16.mxu0 0
        %833 = vmatmul.mubr.bf16.gmra.mrb[0].mxu0 %v671
        %v834 = vpop.f32.mrb[0].mxu0
        %v835 = vadd.f32 1.0, %v834
        %v836 = vpop.f32.mrb[0].mxu0
        %v837 = vpop.f32.mrb[0].mxu0
        %v838 = vadd.f32 1.0, %v837
        %v839 = vpop.f32.mrb[0].mxu0
        %840 = vmatprep.mubr.bf16.mxu0 0
        %841 = vmatmul.mubr.bf16.gmra.mrb[0].mxu0 %v672
        %v842 = vpop.f32.mrb[0].mxu0
        %v843 = vadd.f32 1.0, %v842
        %v844 = vpop.f32.mrb[0].mxu0
        %v845 = vpop.f32.mrb[0].mxu0
        %v846 = vadd.f32 1.0, %v845
        %v847 = vpop.f32.mrb[0].mxu0
        %848 = vmatprep.mubr.bf16.mxu0 0
        %849 = vmatmul.mubr.bf16.gmra.mrb[0].mxu0 %v673
        %v850 = vpop.f32.mrb[0].mxu0
        %v851 = vadd.f32 1.0, %v850
        %v852 = vpop.f32.mrb[0].mxu0
        %v853 = vpop.f32.mrb[0].mxu0
        %v854 = vadd.f32 1.0, %v853
        %v855 = vpop.f32.mrb[0].mxu0
        %856 = vmatprep.mubr.bf16.mxu0 0
        %857 = vmatmul.mubr.bf16.gmra.mrb[0].mxu0 %v674
        %v858 = vpop.f32.mrb[0].mxu0
        %v859 = vadd.f32 1.0, %v858
        %v860 = vpop.f32.mrb[0].mxu0
        %v861 = vpop.f32.mrb[0].mxu0
        %v862 = vadd.f32 1.0, %v861
        %v863 = vpop.f32.mrb[0].mxu0
        %864 = vmatprep.mubr.bf16.mxu0 0
        %865 = vmatmul.mubr.bf16.gmra.mrb[0].mxu0 %v675
        %v866 = vpop.f32.mrb[0].mxu0
        %v867 = vadd.f32 1.0, %v866
        %v868 = vpop.f32.mrb[0].mxu0
        %v869 = vpop.f32.mrb[0].mxu0
        %v870 = vadd.f32 1.0, %v869
        %v871 = vpop.f32.mrb[0].mxu0
        %872 = vmatprep.mubr.bf16.mxu0 0
        %873 = vmatmul.mubr.bf16.gmra.mrb[0].mxu0 %v676
        %v874 = vpop.f32.mrb[0].mxu0
        %v875 = vadd.f32 1.0, %v874
        %v876 = vpop.f32.mrb[0].mxu0
        %v877 = vpop.f32.mrb[0].mxu0
        %v878 = vadd.f32 1.0, %v877
        %v879 = vpop.f32.mrb[0].mxu0
        %880 = vmatprep.mubr.bf16.mxu0 0
        %881 = vmatmul.mubr.bf16.gmra.mrb[0].mxu0 %v677
        %v882 = vpop.f32.mrb[0].mxu0
        %v883 = vadd.f32 1.0, %v882
        %v884 = vpop.f32.mrb[0].mxu0
        %v885 = vpop.f32.mrb[0].mxu0
        %v886 = vadd.f32 1.0, %v885
        %v887 = vpop.f32.mrb[0].mxu0
        %888 = vmatprep.mubr.bf16.mxu0 0
        %889 = vmatmul.mubr.bf16.gmra.mrb[0].mxu0 %v678
        %v890 = vpop.f32.mrb[0].mxu0
        %v891 = vadd.f32 1.0, %v890
        %v892 = vpop.f32.mrb[0].mxu0
        %v893 = vpop.f32.mrb[0].mxu0
        %v894 = vadd.f32 1.0, %v893
        %v895 = vpop.f32.mrb[0].mxu0
        %896 = vmatprep.mubr.bf16.mxu0 0
        %897 = vmatmul.mubr.bf16.gmra.mrb[0].mxu0 %v679
        %v898 = vpop.f32.mrb[0].mxu0
        %v899 = vadd.f32 1.0, %v898
        %v900 = vpop.f32.mrb[0].mxu0
        %v901 = vpop.f32.mrb[0].mxu0
        %v902 = vadd.f32 1.0, %v901
        %v903 = vpop.f32.mrb[0].mxu0
        %904 = vdwg.mxu0
        %v905 = vmul.f32 %v600, %v779
        %v906 = vmul.f32 %v601, %v782
        %v907 = vmul.f32 %v602, %v787
        %v908 = vmul.f32 %v603, %v790
        %v909 = vmul.f32 %v604, %v795
        %v910 = vmul.f32 %v605, %v798
        %v911 = vmul.f32 %v606, %v803
        %v912 = vmul.f32 %v607, %v806
        %v913 = vmul.f32 %v608, %v811
        %v914 = vmul.f32 %v609, %v814
        %v915 = vmul.f32 %v610, %v819
        %v916 = vmul.f32 %v611, %v822
        %v917 = vmul.f32 %v612, %v827
        %v918 = vmul.f32 %v613, %v830
        %v919 = vmul.f32 %v614, %v835
        %v920 = vmul.f32 %v615, %v838
        %v921 = vmul.f32 %v616, %v843
        %v922 = vmul.f32 %v617, %v846
        %v923 = vmul.f32 %v618, %v851
        %v924 = vmul.f32 %v619, %v854
        %v925 = vmul.f32 %v620, %v859
        %v926 = vmul.f32 %v621, %v862
        %v927 = vmul.f32 %v622, %v867
        %v928 = vmul.f32 %v623, %v870
        %v929 = vmul.f32 %v624, %v875
        %v930 = vmul.f32 %v625, %v878
        %v931 = vmul.f32 %v626, %v883
        %v932 = vmul.f32 %v627, %v886
        %v933 = vmul.f32 %v628, %v891
        %v934 = vmul.f32 %v629, %v894
        %v935 = vmul.f32 %v630, %v899
        %v936 = vmul.f32 %v631, %v902
        %937 = vst [vmem:[%s242] sm:$0xff] %v905
        %938 = vst [vmem:[%s242 + $0x8] sm:$0xff] %v906
        %939 = vst [vmem:[%s242 + $0x10] sm:$0xff] %v907
        %940 = vst [vmem:[%s242 + $0x18] sm:$0xff] %v908
        %941 = vst [vmem:[%s242 + $0x20] sm:$0xff] %v909
        %942 = vst [vmem:[%s242 + $0x28] sm:$0xff] %v910
        %943 = vst [vmem:[%s242 + $0x30] sm:$0xff] %v911
        %944 = vst [vmem:[%s242 + $0x38] sm:$0xff] %v912
        %945 = vst [vmem:[%s242 + $0x40] sm:$0xff] %v913
        %946 = vst [vmem:[%s242 + $0x48] sm:$0xff] %v914
        %947 = vst [vmem:[%s242 + $0x50] sm:$0xff] %v915
        %948 = vst [vmem:[%s242 + $0x58] sm:$0xff] %v916
        %949 = vst [vmem:[%s242 + $0x60] sm:$0xff] %v917
        %950 = vst [vmem:[%s242 + $0x68] sm:$0xff] %v918
        %951 = vst [vmem:[%s242 + $0x70] sm:$0xff] %v919
        %952 = vst [vmem:[%s242 + $0x78] sm:$0xff] %v920
        %953 = vst [vmem:[%s242 + $0x80] sm:$0xff] %v921
        %954 = vst [vmem:[%s242 + $0x88] sm:$0xff] %v922
        %955 = vst [vmem:[%s242 + $0x90] sm:$0xff] %v923
        %956 = vst [vmem:[%s242 + $0x98] sm:$0xff] %v924
        %957 = vst [vmem:[%s242 + $0xa0] sm:$0xff] %v925
        %958 = vst [vmem:[%s242 + $0xa8] sm:$0xff] %v926
        %959 = vst [vmem:[%s242 + $0xb0] sm:$0xff] %v927
        %960 = vst [vmem:[%s242 + $0xb8] sm:$0xff] %v928
        %961 = vst [vmem:[%s242 + $0xc0] sm:$0xff] %v929
        %962 = vst [vmem:[%s242 + $0xc8] sm:$0xff] %v930
        %963 = vst [vmem:[%s242 + $0xd0] sm:$0xff] %v931
        %964 = vst [vmem:[%s242 + $0xd8] sm:$0xff] %v932
        %965 = vst [vmem:[%s242 + $0xe0] sm:$0xff] %v933
        %966 = vst [vmem:[%s242 + $0xe8] sm:$0xff] %v934
        %967 = vst [vmem:[%s242 + $0xf0] sm:$0xff] %v935
        %968 = vst [vmem:[%s242 + $0xf8] sm:$0xff] %v936
        %s969 = sand.u32 %s104, 1
        %s970 = scalar_lea.sflag [#allocation4], %s969
        %s971 = sand.u32 %s104, 1
        %s972 = smul.addr %s971, 256
        %s973 = scalar_lea.vmem [#allocation8], %s972
        // Predicated region
        $region45: #{tpu_custom_call.1} parent=31 // pred_check
          %p974 = pneg %p114
        $region46: #{tpu_custom_call.1} parent=31 // pred_check_branch
          %976 = sbr.rel (%p974) target = $region48
        $region47: #{tpu_custom_call.1} parent=31 // pred_region
          %s977 = smul.u32 32, %s23
          %s979 = ssub.s32 4096, 4096
          %980 = vsyncadd %s970, %s979
          %s981 = smul.addr %s977, 128
          %s982 = scalar_lea.hbm %s3, %s981
          %s983 = sshll.u32 %s973, 4
          %s984 = int_to_ptr.vmem [resolvable:$true] %s983
          %989 = dma.vmem_to_hbm [thread:$0]  %s984, 4096, %s982, %s970, 128, 128, 8
        $region48: #{tpu_custom_call.1} parent=31 // pred_fallthru
          _
      $region32: #{tpu_custom_call.1} parent=5 // pred_fallthru
        _
      %p990 = scmp.le.s32.totalorder 2, %s18
      // Predicated region
      $region49: #{tpu_custom_call.1} parent=5 // pred_check
        %p991 = pneg %p990
      $region50: #{tpu_custom_call.1} parent=5 // pred_check_branch
        %993 = sbr.rel (%p991) target = $region52
      $region51: #{tpu_custom_call.1} parent=5 // pred_region
        %s994 = ssub.s32 %s18, 2
        // Predicated region
        $region53: #{tpu_custom_call.1} parent=51 // pred_check
          %p995 = pneg %p120
        $region54: #{tpu_custom_call.1} parent=51 // pred_check_branch
          %997 = sbr.rel (%p995) target = $region56
        $region55: #{tpu_custom_call.1} parent=51 // pred_region
          %s998 = sand.u32 %s105, 1
          %s999 = scalar_lea.sflag [#allocation4], %s998
          %s1000 = sand.u32 %s105, 1
          %s1001 = smul.addr %s1000, 256
          %s1002 = scalar_lea.vmem [#allocation8], %s1001
          %1003 = dma.done %s999, 4096
        $region56: #{tpu_custom_call.1} parent=51 // pred_fallthru
          _
      $region52: #{tpu_custom_call.1} parent=5 // pred_fallthru
        _
    $region6: #{tpu_custom_call.1} parent=1 // loop_footer
      %s22 = sadd.s32 1, %s18
    $region7: #{tpu_custom_call.1} parent=1 // loop_footer_branch
      %17 = sbr.rel target = $region3
    $region8: #{tpu_custom_call.1} parent=1 // loop_exit
      _
    %1004 = vsyncpa [#allocation3], 1
    %s1005 = scalar_lea.sflag [#allocation3], 1
    %1006 = vsyncpa %s1005, 1
    %1007 = vsyncpa [#allocation6], 1
    %s1008 = scalar_lea.sflag [#allocation6], 1
    %1009 = vsyncpa %s1008, 1
    %1010 = vsyncpa [#allocation4], 1
    %s1011 = scalar_lea.sflag [#allocation4], 1
    %1012 = vsyncpa %s1011, 1

</llo_original>
